<compile_context>
chip_gen: v7x
topology: tpu7x:2x2x1
jax: 0.10.0
libtpu: 0.0.40
codegen_flags: <defaults>
</compile_context>

<pallas_src>
import functools

import jax
import jax.numpy as jnp
from jax.experimental import pallas as pl
from jax.experimental.pallas import tpu as pltpu

_H1, _H2 = 100, 50           # hidden sizes from the PyTorch module
_H1P, _H2P = 128, 128        # lane-padded hidden sizes


def _round_up(x, m):
    return (x + m - 1) // m * m


def _mlp_kernel(x_ref, w0_ref, b0_ref, w1_ref, b1_ref, w2_ref, b2_ref, o_ref,
                *, n_outputs):
    # Layer 0: Linear(image_size, 100) + ReLU   (bf16 MXU, f32 accumulate)
    h0 = jnp.dot(x_ref[...], w0_ref[...],
                 preferred_element_type=jnp.float32) + b0_ref[...]
    h0 = jnp.maximum(h0, 0.0)

    # Layer 1: Linear(100, 50) + ReLU
    h1 = jnp.dot(h0.astype(jnp.bfloat16), w1_ref[...],
                 preferred_element_type=jnp.float32) + b1_ref[...]
    h1 = jnp.maximum(h1, 0.0)

    # Layer 2: Linear(50, n_outputs)
    logits = jnp.dot(h1.astype(jnp.bfloat16), w2_ref[...],
                     preferred_element_type=jnp.float32) + b2_ref[...]

    # log_softmax over the real (unpadded) output lanes only (f32 epilogue).
    # -1e30 (not -inf) avoids inf-inf NaNs in padded lanes; they are sliced
    # away in the wrapper anyway.
    col = jax.lax.broadcasted_iota(jnp.int32, logits.shape, 1)
    valid = col < n_outputs
    masked = jnp.where(valid, logits, jnp.full_like(logits, -1e30))
    m = jnp.max(masked, axis=-1, keepdims=True)
    ex = jnp.where(valid, jnp.exp(masked - m), 0.0)
    lse = jnp.log(jnp.sum(ex, axis=-1, keepdims=True)) + m
    o_ref[...] = masked - lse


def _pad_cols(a, to):
    pad = to - a.shape[-1]
    return jnp.pad(a, [(0, 0)] * (a.ndim - 1) + [(0, pad)]) if pad > 0 else a


def _pad_rows(a, to):
    pad = to - a.shape[0]
    return jnp.pad(a, [(0, pad)] + [(0, 0)] * (a.ndim - 1)) if pad > 0 else a


def prepare_params(params, *, image_size, n_outputs):
    """One-time prep: transpose PyTorch (out,in) weights to (in,out), zero-pad
    to lane-friendly sizes, cast weights to bf16 (MXU) and keep biases in f32."""
    w0, b0, w1, b1, w2, b2 = params
    op = _round_up(n_outputs, 128)
    w0p = _pad_cols(jnp.asarray(w0, jnp.float32).T, _H1P).astype(jnp.bfloat16)
    b0p = _pad_cols(jnp.asarray(b0, jnp.float32)[None, :], _H1P)
    w1p = _pad_cols(_pad_rows(jnp.asarray(w1, jnp.float32).T, _H1P),
                    _H2P).astype(jnp.bfloat16)
    b1p = _pad_cols(jnp.asarray(b1, jnp.float32)[None, :], _H2P)
    w2p = _pad_cols(_pad_rows(jnp.asarray(w2, jnp.float32).T, _H2P),
                    op).astype(jnp.bfloat16)
    b2p = _pad_cols(jnp.asarray(b2, jnp.float32)[None, :], op)
    return (w0p, b0p, w1p, b1p, w2p, b2p)


def _pick_tile_b(batch):
    # Multiple of 8 sublanes. Larger tiles amortize the ~0.35 us/step overhead
    # and fill the MXU M dimension; even at 1024 rows the double-buffered
    # working set stays well under the 16 MiB scoped-VMEM default (binding on
    # v5e; safe on v6e/v7x).
    if batch >= 1024:
        return 1024
    if batch >= 512:
        return 512
    if batch >= 256:
        return 256
    return _round_up(batch, 8)


@functools.partial(jax.jit, static_argnames=("image_size", "n_outputs"))
def model_b_forward(x, prepared_params, *, image_size, n_outputs):
    """Forward pass of ModelB. x: any shape whose elements flatten to (-1, image_size)."""
    w0p, b0p, w1p, b1p, w2p, b2p = prepared_params
    op = w2p.shape[-1]                      # round_up(n_outputs, 128)

    x2d = x.reshape(-1, image_size).astype(jnp.bfloat16)   # x.view(-1, image_size)
    batch = x2d.shape[0]

    tile_b = _pick_tile_b(batch)
    batch_p = _round_up(batch, tile_b)
    if batch_p != batch:
        x2d = jnp.pad(x2d, ((0, batch_p - batch), (0, 0)))
    n_tiles = pl.cdiv(batch_p, tile_b)

    kernel = functools.partial(_mlp_kernel, n_outputs=n_outputs)

    const = lambda i: (0, 0)                # weights/biases stay VMEM-resident
    in_specs = [
        pl.BlockSpec((tile_b, image_size), lambda i: (i, 0)),   # x tile
        pl.BlockSpec((image_size, _H1P), const),                # w0
        pl.BlockSpec((1, _H1P), const),                         # b0
        pl.BlockSpec((_H1P, _H2P), const),                      # w1
        pl.BlockSpec((1, _H2P), const),                         # b1
        pl.BlockSpec((_H2P, op), const),                        # w2
        pl.BlockSpec((1, op), const),                           # b2
    ]
    out_specs = pl.BlockSpec((tile_b, op), lambda i: (i, 0))

    weight_bytes = ((w0p.size + w1p.size + w2p.size) * 2
                    + (b0p.size + b1p.size + b2p.size) * 4)
    cost = pl.CostEstimate(
        flops=2 * batch_p * (image_size * _H1P + _H1P * _H2P + _H2P * op),
        transcendentals=batch_p * op,
        bytes_accessed=batch_p * image_size * 2 + batch_p * op * 4 + weight_bytes,
    )

    out_padded = pl.pallas_call(
        kernel,
        out_shape=jax.ShapeDtypeStruct((batch_p, op), jnp.float32),
        grid=(n_tiles,),
        in_specs=in_specs,
        out_specs=out_specs,
        compiler_params=pltpu.CompilerParams(
            dimension_semantics=("parallel",)),
        cost_estimate=cost,
    )(x2d, w0p, b0p, w1p, b1p, w2p, b2p)

    return out_padded[:batch, :n_outputs]


def init_params(key, image_size, n_outputs):
    """Deterministic init mimicking nn.Linear's U(-1/sqrt(fan_in), 1/sqrt(fan_in))."""
    dims = [(_H1, image_size), (_H2, _H1), (n_outputs, _H2)]
    params = []
    for (out_d, in_d) in dims:
        key, kw, kb = jax.random.split(key, 3)
        bound = 1.0 / (in_d ** 0.5)
        w = jax.random.uniform(kw, (out_d, in_d), jnp.float32, -bound, bound)
        b = jax.random.uniform(kb, (out_d,), jnp.float32, -bound, bound)
        params += [w, b]
    return tuple(params)


if __name__ == "__main__":
    # Small MNIST-like setup: batch=8, 1x8x8 images -> image_size=64, 10 classes.
    image_size = 64
    n_outputs = 10
    batch = 8

    key = jax.random.PRNGKey(0)
    key, kx = jax.random.split(key)
    x = jax.random.normal(kx, (batch, 1, 8, 8), dtype=jnp.float32)

    raw_params = init_params(key, image_size, n_outputs)
    # One-time weight prep (hoisted out of the per-call hot path).
    prepared = jax.tree_util.tree_map(
        jax.block_until_ready,
        prepare_params(raw_params, image_size=image_size, n_outputs=n_outputs))

    out = model_b_forward(x, prepared, image_size=image_size, n_outputs=n_outputs)
    out = jax.block_until_ready(out)

    # Sanity: shape and log_softmax rows exponentiate-sum to 1.
    assert out.shape == (batch, n_outputs)
    row_sums = jnp.sum(jnp.exp(out), axis=1)
    assert bool(jnp.all(jnp.abs(row_sums - 1.0) < 2e-3)), row_sums

    # Cross-check against a pure-JAX f32 reference of the same module.
    w0, b0, w1, b1, w2, b2 = raw_params
    h = jnp.maximum(x.reshape(-1, image_size) @ w0.T + b0, 0.0)
    h = jnp.maximum(h @ w1.T + b1, 0.0)
    logits = h @ w2.T + b2
    ref = jax.nn.log_softmax(logits, axis=-1)
    assert bool(jnp.all(jnp.abs(out - ref) < 5e-2)), jnp.max(jnp.abs(out - ref))

    print("KERNEL_OK")
</pallas_src>

<mosaic_0001>
module attributes {stable_mosaic.version = 11 : i64} {
  func.func @_mlp_kernel(%arg0: i32, %arg1: memref<8x64xbf16, #tpu.memory_space<vmem>>, %arg2: memref<64x128xbf16, #tpu.memory_space<vmem>>, %arg3: memref<1x128xf32, #tpu.memory_space<vmem>>, %arg4: memref<128x128xbf16, #tpu.memory_space<vmem>>, %arg5: memref<1x128xf32, #tpu.memory_space<vmem>>, %arg6: memref<128x128xbf16, #tpu.memory_space<vmem>>, %arg7: memref<1x128xf32, #tpu.memory_space<vmem>>, %arg8: memref<8x128xf32, #tpu.memory_space<vmem>>) attributes {dimension_semantics = [#tpu.dimension_semantics<parallel>], iteration_bounds = array<i64: 1>, scalar_prefetch = 0 : i64, scratch_operands = 0 : i64, tpu.core_type = #tpu.core_type<tc>, window_params = [{transform_indices = @transform_0, window_bounds = array<i64: 8, 64>}, {pipeline_mode = #tpu.pipeline_mode<synchronous>, transform_indices = @transform_1, window_bounds = array<i64: 64, 128>}, {pipeline_mode = #tpu.pipeline_mode<synchronous>, transform_indices = @transform_2, window_bounds = array<i64: 1, 128>}, {pipeline_mode = #tpu.pipeline_mode<synchronous>, transform_indices = @transform_3, window_bounds = array<i64: 128, 128>}, {pipeline_mode = #tpu.pipeline_mode<synchronous>, transform_indices = @transform_4, window_bounds = array<i64: 1, 128>}, {pipeline_mode = #tpu.pipeline_mode<synchronous>, transform_indices = @transform_5, window_bounds = array<i64: 128, 128>}, {pipeline_mode = #tpu.pipeline_mode<synchronous>, transform_indices = @transform_6, window_bounds = array<i64: 1, 128>}, {transform_indices = @transform_7, window_bounds = array<i64: 8, 128>}]} {
    %c0 = arith.constant 0 : index
    %c0_0 = arith.constant 0 : index
    %0 = vector.load %arg1[%c0, %c0_0] : memref<8x64xbf16, #tpu.memory_space<vmem>>, vector<8x64xbf16>
    %c0_1 = arith.constant 0 : index
    %c0_2 = arith.constant 0 : index
    %1 = vector.load %arg2[%c0_1, %c0_2] : memref<64x128xbf16, #tpu.memory_space<vmem>>, vector<64x128xbf16>
    %cst = arith.constant dense<0.000000e+00> : vector<8x128xf32>
    %2 = tpu.matmul %0, %1, %cst {dimension_numbers = #tpu.dot_dimension_numbers<[1], [0], [0], [1], [0, 0, 1, 1], [], []>} : vector<8x64xbf16>, vector<64x128xbf16>, vector<8x128xf32> -> vector<8x128xf32>
    %c0_3 = arith.constant 0 : index
    %c0_4 = arith.constant 0 : index
    %3 = vector.load %arg3[%c0_3, %c0_4] : memref<1x128xf32, #tpu.memory_space<vmem>>, vector<1x128xf32>
    %4 = vector.broadcast %3 : vector<1x128xf32> to vector<8x128xf32>
    %5 = arith.addf %2, %4 : vector<8x128xf32>
    %cst_5 = arith.constant 0.000000e+00 : f32
    %6 = vector.broadcast %cst_5 : f32 to vector<8x128xf32>
    %7 = arith.maximumf %5, %6 : vector<8x128xf32>
    %8 = arith.truncf %7 : vector<8x128xf32> to vector<8x128xbf16>
    %c0_6 = arith.constant 0 : index
    %c0_7 = arith.constant 0 : index
    %9 = vector.load %arg4[%c0_6, %c0_7] : memref<128x128xbf16, #tpu.memory_space<vmem>>, vector<128x128xbf16>
    %cst_8 = arith.constant dense<0.000000e+00> : vector<8x128xf32>
    %10 = tpu.matmul %8, %9, %cst_8 {dimension_numbers = #tpu.dot_dimension_numbers<[1], [0], [0], [1], [0, 0, 1, 1], [], []>} : vector<8x128xbf16>, vector<128x128xbf16>, vector<8x128xf32> -> vector<8x128xf32>
    %c0_9 = arith.constant 0 : index
    %c0_10 = arith.constant 0 : index
    %11 = vector.load %arg5[%c0_9, %c0_10] : memref<1x128xf32, #tpu.memory_space<vmem>>, vector<1x128xf32>
    %12 = vector.broadcast %11 : vector<1x128xf32> to vector<8x128xf32>
    %13 = arith.addf %10, %12 : vector<8x128xf32>
    %cst_11 = arith.constant 0.000000e+00 : f32
    %14 = vector.broadcast %cst_11 : f32 to vector<8x128xf32>
    %15 = arith.maximumf %13, %14 : vector<8x128xf32>
    %16 = arith.truncf %15 : vector<8x128xf32> to vector<8x128xbf16>
    %c0_12 = arith.constant 0 : index
    %c0_13 = arith.constant 0 : index
    %17 = vector.load %arg6[%c0_12, %c0_13] : memref<128x128xbf16, #tpu.memory_space<vmem>>, vector<128x128xbf16>
    %cst_14 = arith.constant dense<0.000000e+00> : vector<8x128xf32>
    %18 = tpu.matmul %16, %17, %cst_14 {dimension_numbers = #tpu.dot_dimension_numbers<[1], [0], [0], [1], [0, 0, 1, 1], [], []>} : vector<8x128xbf16>, vector<128x128xbf16>, vector<8x128xf32> -> vector<8x128xf32>
    %c0_15 = arith.constant 0 : index
    %c0_16 = arith.constant 0 : index
    %19 = vector.load %arg7[%c0_15, %c0_16] : memref<1x128xf32, #tpu.memory_space<vmem>>, vector<1x128xf32>
    %20 = vector.broadcast %19 : vector<1x128xf32> to vector<8x128xf32>
    %21 = arith.addf %18, %20 : vector<8x128xf32>
    %22 = tpu.iota {dimensions = array<i32: 1>} : vector<8x128xi32>
    %c10_i32 = arith.constant 10 : i32
    %23 = vector.broadcast %c10_i32 : i32 to vector<8x128xi32>
    %24 = arith.cmpi slt, %22, %23 : vector<8x128xi32>
    %cst_17 = arith.constant -1.000000e+30 : f32
    %25 = vector.broadcast %cst_17 : f32 to vector<8x128xf32>
    %26 = arith.select %24, %21, %25 : vector<8x128xi1>, vector<8x128xf32>
    %cst_18 = arith.constant dense<0xFF800000> : vector<8xf32>
    %27 = vector.multi_reduction <maximumf>, %26, %cst_18 [1] : vector<8x128xf32> to vector<8xf32>
    %28 = vector.shape_cast %27 : vector<8xf32> to vector<8x1xf32>
    %29 = vector.broadcast %28 : vector<8x1xf32> to vector<8x128xf32>
    %30 = arith.subf %26, %29 : vector<8x128xf32>
    %31 = math.exp %30 : vector<8x128xf32>
    %cst_19 = arith.constant 0.000000e+00 : f32
    %32 = vector.broadcast %cst_19 : f32 to vector<8x128xf32>
    %33 = arith.select %24, %31, %32 : vector<8x128xi1>, vector<8x128xf32>
    %cst_20 = arith.constant dense<0.000000e+00> : vector<8xf32>
    %34 = vector.multi_reduction <add>, %33, %cst_20 [1] : vector<8x128xf32> to vector<8xf32>
    %35 = vector.shape_cast %34 : vector<8xf32> to vector<8x1xf32>
    %36 = math.log %35 : vector<8x1xf32>
    %37 = arith.addf %36, %28 : vector<8x1xf32>
    %38 = vector.broadcast %37 : vector<8x1xf32> to vector<8x128xf32>
    %39 = arith.subf %26, %38 : vector<8x128xf32>
    %c0_21 = arith.constant 0 : index
    %c0_22 = arith.constant 0 : index
    %40 = vector.load %arg8[%c0_21, %c0_22] : memref<8x128xf32, #tpu.memory_space<vmem>>, vector<8x128xf32>
    tpu.vector_store %arg8[%c0_21, %c0_22], %39 {strides = array<i32>} : memref<8x128xf32, #tpu.memory_space<vmem>>, vector<8x128xf32>,
    return
  }
  func.func @transform_0(%arg0: i32) -> (i32, i32) {
    %c0_i32 = arith.constant 0 : i32
    %c0_i32_0 = arith.constant 0 : i32
    return %arg0, %c0_i32 : i32, i32
  }
  func.func @transform_1(%arg0: i32) -> (i32, i32) {
    %c0_i32 = arith.constant 0 : i32
    %c0_i32_0 = arith.constant 0 : i32
    %c0_i32_1 = arith.constant 0 : i32
    return %c0_i32, %c0_i32_0 : i32, i32
  }
  func.func @transform_2(%arg0: i32) -> (i32, i32) {
    %c0_i32 = arith.constant 0 : i32
    %c0_i32_0 = arith.constant 0 : i32
    %c0_i32_1 = arith.constant 0 : i32
    return %c0_i32, %c0_i32_0 : i32, i32
  }
  func.func @transform_3(%arg0: i32) -> (i32, i32) {
    %c0_i32 = arith.constant 0 : i32
    %c0_i32_0 = arith.constant 0 : i32
    %c0_i32_1 = arith.constant 0 : i32
    return %c0_i32, %c0_i32_0 : i32, i32
  }
  func.func @transform_4(%arg0: i32) -> (i32, i32) {
    %c0_i32 = arith.constant 0 : i32
    %c0_i32_0 = arith.constant 0 : i32
    %c0_i32_1 = arith.constant 0 : i32
    return %c0_i32, %c0_i32_0 : i32, i32
  }
  func.func @transform_5(%arg0: i32) -> (i32, i32) {
    %c0_i32 = arith.constant 0 : i32
    %c0_i32_0 = arith.constant 0 : i32
    %c0_i32_1 = arith.constant 0 : i32
    return %c0_i32, %c0_i32_0 : i32, i32
  }
  func.func @transform_6(%arg0: i32) -> (i32, i32) {
    %c0_i32 = arith.constant 0 : i32
    %c0_i32_0 = arith.constant 0 : i32
    %c0_i32_1 = arith.constant 0 : i32
    return %c0_i32, %c0_i32_0 : i32, i32
  }
  func.func @transform_7(%arg0: i32) -> (i32, i32) {
    %c0_i32 = arith.constant 0 : i32
    %c0_i32_0 = arith.constant 0 : i32
    return %arg0, %c0_i32 : i32, i32
  }
}

</mosaic_0001>

<llo_original>
// kernel: model_b_forward.1
$region0: #{model_b_forward.1}
  #allocation0 [shape = 'u32[]', space=smem, size = 0x4, offset = 0x4, fixed_abs, tag = 'smem constant byte address 0x4 - core index']
  #allocation1 [shape = 'u32[144,128]{1,0:T(1,128)}', space=vmem, size = 0x12000, scoped, tag = 'internal scratch']
  %s0 = inlined_call_operand.vmem [shape: bf16[8,64], index: 0, kind: input, shape index: {}]
  %s1 = inlined_call_operand.hbm [shape: bf16[64,128], index: 1, kind: input, shape index: {}]
  %s2 = inlined_call_operand.vmem [shape: f32[1,128], index: 2, kind: input, shape index: {}]
  %s3 = inlined_call_operand.vmem [shape: bf16[128,128], index: 3, kind: input, shape index: {}]
  %s4 = inlined_call_operand.vmem [shape: f32[1,128], index: 4, kind: input, shape index: {}]
  %s5 = inlined_call_operand.vmem [shape: bf16[128,128], index: 5, kind: input, shape index: {}]
  %s6 = inlined_call_operand.vmem [shape: f32[1,128], index: 6, kind: input, shape index: {}]
  %s7 = inlined_call_operand.hbm [shape: f32[8,128], index: 7, kind: output, shape index: {}]
  %s8 = sld [smem:[#allocation0]]
  $region42: #{model_b_forward.1} parent=0
    _
  %s10 = ssub.s32 1, %s8
  %s11 = scalar_select 0, %s10, %s8
  $region1: #{model_b_forward.1} parent=0
    #allocation2 [shape = 'u8[16384]{0}', space=vmem, size = 0x4000, scoped, tag = 'input window, operand 1, single buffered']
    #allocation3 [shape = 's32[1]{0}', space=sflag, size = 0x4, scoped, tag = 'scoped memory for model_b_forward.1']
    #allocation4 [shape = 's32[1]{0}', space=sflag, size = 0x4, scoped, tag = 'scoped memory for model_b_forward.1']
    #allocation5 [shape = 'u8[4096]{0}', space=vmem, size = 0x1000, scoped, tag = 'output window, operand 0, single buffered']
    %12 = vsyncpa [#allocation3], 0
    %13 = vsyncpa [#allocation4], 0
    // Predicated region
    $region2: #{model_b_forward.1} parent=1 // pred_check
      _
    $region3: #{model_b_forward.1} parent=1 // pred_check_branch
      %15 = sbr.rel (0) target = $region5
    $region4: #{model_b_forward.1} parent=1 // pred_region
      _
    $region5: #{model_b_forward.1} parent=1 // pred_fallthru
      _
    // Predicated region
    $region6: #{model_b_forward.1} parent=1 // pred_check
      _
    $region7: #{model_b_forward.1} parent=1 // pred_check_branch
      %17 = sbr.rel (0) target = $region9
    $region8: #{model_b_forward.1} parent=1 // pred_region
      %s19 = ssub.s32 512, 512
      %20 = vsyncadd [#allocation3], %s19
      %s21 = sshll.u32 [#allocation2], 4
      %s22 = int_to_ptr.vmem [resolvable:$true] %s21
      %27 = dma.hbm_to_vmem [thread:$0]  %s1, 512, %s22, [#allocation3], 64, 64, 4
    $region9: #{model_b_forward.1} parent=1 // pred_fallthru
      _
    // Predicated region
    $region10: #{model_b_forward.1} parent=1 // pred_check
      _
    $region11: #{model_b_forward.1} parent=1 // pred_check_branch
      %29 = sbr.rel (0) target = $region13
    $region12: #{model_b_forward.1} parent=1 // pred_region
      _
    $region13: #{model_b_forward.1} parent=1 // pred_fallthru
      _
    // Predicated region
    $region14: #{model_b_forward.1} parent=1 // pred_check
      _
    $region15: #{model_b_forward.1} parent=1 // pred_check_branch
      %31 = sbr.rel (0) target = $region17
    $region16: #{model_b_forward.1} parent=1 // pred_region
      _
    $region17: #{model_b_forward.1} parent=1 // pred_fallthru
      _
    // Predicated region
    $region18: #{model_b_forward.1} parent=1 // pred_check
      _
    $region19: #{model_b_forward.1} parent=1 // pred_check_branch
      %33 = sbr.rel (0) target = $region21
    $region20: #{model_b_forward.1} parent=1 // pred_region
      _
    $region21: #{model_b_forward.1} parent=1 // pred_fallthru
      _
    // Predicated region
    $region22: #{model_b_forward.1} parent=1 // pred_check
      _
    $region23: #{model_b_forward.1} parent=1 // pred_check_branch
      %35 = sbr.rel (0) target = $region25
    $region24: #{model_b_forward.1} parent=1 // pred_region
      _
    $region25: #{model_b_forward.1} parent=1 // pred_fallthru
      _
    // Predicated region
    $region26: #{model_b_forward.1} parent=1 // pred_check
      _
    $region27: #{model_b_forward.1} parent=1 // pred_check_branch
      %37 = sbr.rel (0) target = $region29
    $region28: #{model_b_forward.1} parent=1 // pred_region
      _
    $region29: #{model_b_forward.1} parent=1 // pred_fallthru
      _
    // Predicated region
    $region30: #{model_b_forward.1} parent=1 // pred_check
      _
    $region31: #{model_b_forward.1} parent=1 // pred_check_branch
      %39 = sbr.rel (0) target = $region33
    $region32: #{model_b_forward.1} parent=1 // pred_region
      %40 = dma.done [#allocation3], 512
    $region33: #{model_b_forward.1} parent=1 // pred_fallthru
      _
    %v42 = vld [vmem:[%s0] sm:$0xf]
    %v43 = vld [vmem:[#allocation2] sm:$0xf]
    %v44 = vld [vmem:[#allocation2 + $0x4] sm:$0xf]
    %v45 = vld [vmem:[#allocation2 + $0x8] sm:$0xf]
    %v46 = vld [vmem:[#allocation2 + $0xc] sm:$0xf]
    %v47 = vld [vmem:[#allocation2 + $0x10] sm:$0xf]
    %v48 = vld [vmem:[#allocation2 + $0x14] sm:$0xf]
    %v49 = vld [vmem:[#allocation2 + $0x18] sm:$0xf]
    %v50 = vld [vmem:[#allocation2 + $0x1c] sm:$0xf]
    %v51 = vld [vmem:[%s2] sm:$0x1]
    %v53 = vlaneseq
    %v54 = vshrl.u32 %v53, 7
    %v55 = vsub.s32 0, %v54
    %v56 = vrot.slane %v51, %v55
    %v66 = vunpack.c.l.b16 %v43
    %v67 = vunpack.c.l.b16 %v44
    %v68 = vunpack.c.l.b16 %v45
    %v69 = vunpack.c.l.b16 %v46
    %v70 = vunpack.c.l.b16 %v47
    %v71 = vunpack.c.l.b16 %v48
    %v72 = vunpack.c.l.b16 %v49
    %v73 = vunpack.c.l.b16 %v50
    %v74 = vpack.c.b16 %v67, %v66
    %v75 = vpack.c.b16 %v69, %v68
    %v76 = vpack.c.b16 %v71, %v70
    %v77 = vpack.c.b16 %v73, %v72
    %vm82 = vcmask 523264
    %v84 = vsel %vm82, %v42, 0
    %86 = vmatprep.subr.bf16.mxu0 0
    %87 = vmatpush1.bf16.msra.mxu0 %v74
    %88 = vmatprep.subr.bf16.mxu0 0
    %89 = vmatpush1.bf16.msra.mxu0 %v75
    %90 = vmatprep.subr.bf16.mxu0 0
    %91 = vmatpush1.bf16.msra.mxu0 %v76
    %92 = vmatprep.subr.bf16.mxu0 0
    %93 = vmatpush1.bf16.msra.mxu0 %v77
    %94 = vmatprep.subr.bf16.mxu0 0
    %95 = vmatpush1.bf16.msra.mxu0 0
    %96 = vmatprep.subr.bf16.mxu0 0
    %97 = vmatpush1.bf16.msra.mxu0 0
    %98 = vmatprep.subr.bf16.mxu0 0
    %99 = vmatpush1.bf16.msra.mxu0 0
    %100 = vmatprep.subr.bf16.mxu0 0
    %101 = vmatpush1.bf16.msra.mxu0 0
    %102 = vmatprep.subr.bf16.mxu0 0
    %103 = vmatpush1.bf16.msra.mxu0 0
    %104 = vmatprep.subr.bf16.mxu0 0
    %105 = vmatpush1.bf16.msra.mxu0 0
    %106 = vmatprep.subr.bf16.mxu0 0
    %107 = vmatpush1.bf16.msra.mxu0 0
    %108 = vmatprep.subr.bf16.mxu0 0
    %109 = vmatpush1.bf16.msra.mxu0 0
    %110 = vmatprep.subr.bf16.mxu0 0
    %111 = vmatpush1.bf16.msra.mxu0 0
    %112 = vmatprep.subr.bf16.mxu0 0
    %113 = vmatpush1.bf16.msra.mxu0 0
    %114 = vmatprep.subr.bf16.mxu0 0
    %115 = vmatpush1.bf16.msra.mxu0 0
    %116 = vmatprep.subr.bf16.mxu0 0
    %117 = vmatpush1.bf16.msra.mxu0 0
    %118 = vmatprep.mubr.bf16.mxu0 0
    %119 = vmatmul.mubr.bf16.gmra.mrb[0].mxu0 %v84
    %v120 = vpop.f32.mrb[0].mxu0
    %v121 = vadd.f32 %v56, %v120
    %v122 = vpop.f32.mrb[0].mxu0
    %v123 = vpop.f32.mrb[0].mxu0
    %v124 = vpop.f32.mrb[0].mxu0
    %125 = vdwg.mxu0
    %v126 = vmax.f32 %v121, 0.0
    %v127 = vpack.c.bf16 %v126, %v126
    %v128 = vld [vmem:[%s3] sm:$0xf]
    %v129 = vld [vmem:[%s3 + $0x4] sm:$0xf]
    %v130 = vld [vmem:[%s3 + $0x8] sm:$0xf]
    %v131 = vld [vmem:[%s3 + $0xc] sm:$0xf]
    %v132 = vld [vmem:[%s3 + $0x10] sm:$0xf]
    %v133 = vld [vmem:[%s3 + $0x14] sm:$0xf]
    %v134 = vld [vmem:[%s3 + $0x18] sm:$0xf]
    %v135 = vld [vmem:[%s3 + $0x1c] sm:$0xf]
    %v136 = vld [vmem:[%s3 + $0x20] sm:$0xf]
    %v137 = vld [vmem:[%s3 + $0x24] sm:$0xf]
    %v138 = vld [vmem:[%s3 + $0x28] sm:$0xf]
    %v139 = vld [vmem:[%s3 + $0x2c] sm:$0xf]
    %v140 = vld [vmem:[%s3 + $0x30] sm:$0xf]
    %v141 = vld [vmem:[%s3 + $0x34] sm:$0xf]
    %v142 = vld [vmem:[%s3 + $0x38] sm:$0xf]
    %v143 = vld [vmem:[%s3 + $0x3c] sm:$0xf]
    %v144 = vld [vmem:[%s4] sm:$0x1]
    %v146 = vlaneseq
    %v147 = vshrl.u32 %v146, 7
    %v148 = vsub.s32 0, %v147
    %v149 = vrot.slane %v144, %v148
    %v167 = vunpack.c.l.b16 %v128
    %v168 = vunpack.c.l.b16 %v129
    %v169 = vunpack.c.l.b16 %v130
    %v170 = vunpack.c.l.b16 %v131
    %v171 = vunpack.c.l.b16 %v132
    %v172 = vunpack.c.l.b16 %v133
    %v173 = vunpack.c.l.b16 %v134
    %v174 = vunpack.c.l.b16 %v135
    %v175 = vunpack.c.l.b16 %v136
    %v176 = vunpack.c.l.b16 %v137
    %v177 = vunpack.c.l.b16 %v138
    %v178 = vunpack.c.l.b16 %v139
    %v179 = vunpack.c.l.b16 %v140
    %v180 = vunpack.c.l.b16 %v141
    %v181 = vunpack.c.l.b16 %v142
    %v182 = vunpack.c.l.b16 %v143
    %v183 = vpack.c.b16 %v168, %v167
    %v184 = vpack.c.b16 %v170, %v169
    %v185 = vpack.c.b16 %v172, %v171
    %v186 = vpack.c.b16 %v174, %v173
    %v187 = vpack.c.b16 %v176, %v175
    %v188 = vpack.c.b16 %v178, %v177
    %v189 = vpack.c.b16 %v180, %v179
    %v190 = vpack.c.b16 %v182, %v181
    %199 = vmatprep.subr.bf16.mxu0 0
    %200 = vmatpush1.bf16.msra.mxu0 %v183
    %201 = vmatprep.subr.bf16.mxu0 0
    %202 = vmatpush1.bf16.msra.mxu0 %v184
    %203 = vmatprep.subr.bf16.mxu0 0
    %204 = vmatpush1.bf16.msra.mxu0 %v185
    %205 = vmatprep.subr.bf16.mxu0 0
    %206 = vmatpush1.bf16.msra.mxu0 %v186
    %207 = vmatprep.subr.bf16.mxu0 0
    %208 = vmatpush1.bf16.msra.mxu0 %v187
    %209 = vmatprep.subr.bf16.mxu0 0
    %210 = vmatpush1.bf16.msra.mxu0 %v188
    %211 = vmatprep.subr.bf16.mxu0 0
    %212 = vmatpush1.bf16.msra.mxu0 %v189
    %213 = vmatprep.subr.bf16.mxu0 0
    %214 = vmatpush1.bf16.msra.mxu0 %v190
    %215 = vmatprep.subr.bf16.mxu0 0
    %216 = vmatpush1.bf16.msra.mxu0 0
    %217 = vmatprep.subr.bf16.mxu0 0
    %218 = vmatpush1.bf16.msra.mxu0 0
    %219 = vmatprep.subr.bf16.mxu0 0
    %220 = vmatpush1.bf16.msra.mxu0 0
    %221 = vmatprep.subr.bf16.mxu0 0
    %222 = vmatpush1.bf16.msra.mxu0 0
    %223 = vmatprep.subr.bf16.mxu0 0
    %224 = vmatpush1.bf16.msra.mxu0 0
    %225 = vmatprep.subr.bf16.mxu0 0
    %226 = vmatpush1.bf16.msra.mxu0 0
    %227 = vmatprep.subr.bf16.mxu0 0
    %228 = vmatpush1.bf16.msra.mxu0 0
    %229 = vmatprep.subr.bf16.mxu0 0
    %230 = vmatpush1.bf16.msra.mxu0 0
    %231 = vmatprep.mubr.bf16.mxu0 0
    %232 = vmatmul.mubr.bf16.gmra.mrb[0].mxu0 %v127
    %v233 = vpop.f32.mrb[0].mxu0
    %v234 = vadd.f32 %v149, %v233
    %v235 = vpop.f32.mrb[0].mxu0
    %v236 = vpop.f32.mrb[0].mxu0
    %v237 = vpop.f32.mrb[0].mxu0
    %238 = vdwg.mxu0
    %v239 = vmax.f32 %v234, 0.0
    %v240 = vpack.c.bf16 %v239, %v239
    %v241 = vld [vmem:[%s5] sm:$0xf]
    %v242 = vld [vmem:[%s5 + $0x4] sm:$0xf]
    %v243 = vld [vmem:[%s5 + $0x8] sm:$0xf]
    %v244 = vld [vmem:[%s5 + $0xc] sm:$0xf]
    %v245 = vld [vmem:[%s5 + $0x10] sm:$0xf]
    %v246 = vld [vmem:[%s5 + $0x14] sm:$0xf]
    %v247 = vld [vmem:[%s5 + $0x18] sm:$0xf]
    %v248 = vld [vmem:[%s5 + $0x1c] sm:$0xf]
    %v249 = vld [vmem:[%s5 + $0x20] sm:$0xf]
    %v250 = vld [vmem:[%s5 + $0x24] sm:$0xf]
    %v251 = vld [vmem:[%s5 + $0x28] sm:$0xf]
    %v252 = vld [vmem:[%s5 + $0x2c] sm:$0xf]
    %v253 = vld [vmem:[%s5 + $0x30] sm:$0xf]
    %v254 = vld [vmem:[%s5 + $0x34] sm:$0xf]
    %v255 = vld [vmem:[%s5 + $0x38] sm:$0xf]
    %v256 = vld [vmem:[%s5 + $0x3c] sm:$0xf]
    %v257 = vld [vmem:[%s6] sm:$0x1]
    %v259 = vlaneseq
    %v260 = vshrl.u32 %v259, 7
    %v261 = vsub.s32 0, %v260
    %v262 = vrot.slane %v257, %v261
    %v280 = vunpack.c.l.b16 %v241
    %v281 = vunpack.c.l.b16 %v242
    %v282 = vunpack.c.l.b16 %v243
    %v283 = vunpack.c.l.b16 %v244
    %v284 = vunpack.c.l.b16 %v245
    %v285 = vunpack.c.l.b16 %v246
    %v286 = vunpack.c.l.b16 %v247
    %v287 = vunpack.c.l.b16 %v248
    %v288 = vunpack.c.l.b16 %v249
    %v289 = vunpack.c.l.b16 %v250
    %v290 = vunpack.c.l.b16 %v251
    %v291 = vunpack.c.l.b16 %v252
    %v292 = vunpack.c.l.b16 %v253
    %v293 = vunpack.c.l.b16 %v254
    %v294 = vunpack.c.l.b16 %v255
    %v295 = vunpack.c.l.b16 %v256
    %v296 = vpack.c.b16 %v281, %v280
    %v297 = vpack.c.b16 %v283, %v282
    %v298 = vpack.c.b16 %v285, %v284
    %v299 = vpack.c.b16 %v287, %v286
    %v300 = vpack.c.b16 %v289, %v288
    %v301 = vpack.c.b16 %v291, %v290
    %v302 = vpack.c.b16 %v293, %v292
    %v303 = vpack.c.b16 %v295, %v294
    %312 = vmatprep.subr.bf16.mxu0 0
    %313 = vmatpush1.bf16.msra.mxu0 %v296
    %314 = vmatprep.subr.bf16.mxu0 0
    %315 = vmatpush1.bf16.msra.mxu0 %v297
    %316 = vmatprep.subr.bf16.mxu0 0
    %317 = vmatpush1.bf16.msra.mxu0 %v298
    %318 = vmatprep.subr.bf16.mxu0 0
    %319 = vmatpush1.bf16.msra.mxu0 %v299
    %320 = vmatprep.subr.bf16.mxu0 0
    %321 = vmatpush1.bf16.msra.mxu0 %v300
    %322 = vmatprep.subr.bf16.mxu0 0
    %323 = vmatpush1.bf16.msra.mxu0 %v301
    %324 = vmatprep.subr.bf16.mxu0 0
    %325 = vmatpush1.bf16.msra.mxu0 %v302
    %326 = vmatprep.subr.bf16.mxu0 0
    %327 = vmatpush1.bf16.msra.mxu0 %v303
    %328 = vmatprep.subr.bf16.mxu0 0
    %329 = vmatpush1.bf16.msra.mxu0 0
    %330 = vmatprep.subr.bf16.mxu0 0
    %331 = vmatpush1.bf16.msra.mxu0 0
    %332 = vmatprep.subr.bf16.mxu0 0
    %333 = vmatpush1.bf16.msra.mxu0 0
    %334 = vmatprep.subr.bf16.mxu0 0
    %335 = vmatpush1.bf16.msra.mxu0 0
    %336 = vmatprep.subr.bf16.mxu0 0
    %337 = vmatpush1.bf16.msra.mxu0 0
    %338 = vmatprep.subr.bf16.mxu0 0
    %339 = vmatpush1.bf16.msra.mxu0 0
    %340 = vmatprep.subr.bf16.mxu0 0
    %341 = vmatpush1.bf16.msra.mxu0 0
    %342 = vmatprep.subr.bf16.mxu0 0
    %343 = vmatpush1.bf16.msra.mxu0 0
    %344 = vmatprep.mubr.bf16.mxu0 0
    %345 = vmatmul.mubr.bf16.gmra.mrb[0].mxu0 %v240
    %v346 = vpop.f32.mrb[0].mxu0
    %v347 = vadd.f32 %v262, %v346
    %v348 = vpop.f32.mrb[0].mxu0
    %v349 = vpop.f32.mrb[0].mxu0
    %v350 = vpop.f32.mrb[0].mxu0
    %351 = vdwg.mxu0
    %v352 = vlaneseq
    %v353 = vand.u32 %v352, 127
    %vm354 = vcmp.lt.s32.totalorder %v353, 10
    %v355 = vsel %vm354, %v347, -1e+30
    %356 = vmax.xlane.f32.xlu0 %v355
    %v357 = vpop.xlane.xlu0 %356
    %v358 = vsub.f32 %v355, %v357
    %v359 = vmul.f32 %v358, 1.442695
    %v360 = vpow.pop %v359
    %v361 = vsel %vm354, %v360, 0.0
    %362 = vadd.xlane.f32.xlu0 %v361
    %v363 = vpop.xlane.xlu0 %362
    %v364 = vlog2.pop %v363
    %v365 = vmul.f32 %v364, 0.6931472
    %v366 = vadd.f32 %v365, %v357
    %v367 = vsub.f32 %v355, %v366
    %368 = vst [vmem:[#allocation5] sm:$0xff] %v367
    // Predicated region
    $region34: #{model_b_forward.1} parent=1 // pred_check
      _
    $region35: #{model_b_forward.1} parent=1 // pred_check_branch
      %370 = sbr.rel (0) target = $region37
    $region36: #{model_b_forward.1} parent=1 // pred_region
      %s372 = ssub.s32 128, 128
      %373 = vsyncadd [#allocation4], %s372
      %s375 = sshll.u32 [#allocation5], 4
      %s376 = int_to_ptr.vmem [resolvable:$true] %s375
      %378 = dma.vmem_to_hbm [thread:$0]  %s376, 128, %s7, [#allocation4]
    $region37: #{model_b_forward.1} parent=1 // pred_fallthru
      _
    // Predicated region
    $region38: #{model_b_forward.1} parent=1 // pred_check
      _
    $region39: #{model_b_forward.1} parent=1 // pred_check_branch
      %380 = sbr.rel (0) target = $region41
    $region40: #{model_b_forward.1} parent=1 // pred_region
      %381 = dma.done [#allocation4], 128
    $region41: #{model_b_forward.1} parent=1 // pred_fallthru
      _
    %382 = vsyncpa [#allocation3], 1
    %383 = vsyncpa [#allocation4], 1

</llo_original>
